<compile_context>
chip_gen: v5e
topology: v5e:2x2
jax: 0.10.0
libtpu: 0.0.40
codegen_flags: <defaults>
</compile_context>

<pallas_src>
import functools

import jax
import jax.numpy as jnp
from jax.experimental import pallas as pl
from jax.experimental.pallas import tpu as pltpu

EPS = 1e-12


def intermediate_kernel(x_ref, gamma_ref, beta_ref, w1_ref, b1_ref, w2_ref, b2_ref,
                        o_ref, h_ref, acc_ref):
    """Grid = (row tiles, I chunks). x/o tiles and the params gamma/beta/b2 are
    resident across the k (I-chunk) axis; w1/b1/w2 stream per chunk."""
    k = pl.program_id(1)

    # --- k == 0: LayerNorm (f32) -> cache h in weight dtype, zero the accumulator ---
    @pl.when(k == 0)
    def _():
        x = x_ref[...].astype(jnp.float32)
        u = jnp.mean(x, axis=-1, keepdims=True)
        d = x - u
        s = jnp.mean(d * d, axis=-1, keepdims=True)
        xn = d * jax.lax.rsqrt(s + EPS)                      # rsqrt: single EUP op
        h = gamma_ref[...].astype(jnp.float32) * xn + beta_ref[...].astype(jnp.float32)
        # Dropout: identity (eval / inference semantics).
        # TODO(synk): training-mode dropout would need pltpu.prng_seed /
        # pltpu.prng_random_bits + 1/(1-p) scaling; not implemented here.
        h_ref[...] = h.astype(h_ref.dtype)                   # stored in weight dtype
        acc_ref[...] = jnp.zeros_like(acc_ref)

    # --- per-chunk: Linear(H -> tI) + ReLU, then partial Linear(tI -> H) accumulation ---
    h1 = jnp.dot(h_ref[...], w1_ref[...], preferred_element_type=jnp.float32)
    h1 = jnp.maximum(h1 + b1_ref[...].astype(jnp.float32), 0.0)
    acc_ref[...] += jnp.dot(h1.astype(w2_ref.dtype), w2_ref[...],
                            preferred_element_type=jnp.float32)

    # --- last chunk: bias, residual, store ---
    @pl.when(k == pl.num_programs(1) - 1)
    def _():
        out = acc_ref[...] + b2_ref[...].astype(jnp.float32) + x_ref[...].astype(jnp.float32)
        o_ref[...] = out.astype(o_ref.dtype)


def _pick_ti(intermediate_size, cap=512):
    """Largest chunk <= cap that divides I exactly (overhang on the reduction axis
    would contaminate the accumulator)."""
    for cand in (512, 384, 256, 128, 64, 32, 16, 8):
        if cand <= cap and intermediate_size % cand == 0:
            return cand
    return intermediate_size


def intermediate_forward(x, gamma, beta, w1, b1, w2, b2, *, tm=None, ti=None):
    """x: (B, S, H). Weights stored as (in, out) so the kernel computes x @ W + b
    (equivalent to PyTorch x @ weight.T + bias). Weights may be bf16 or f32; they
    are fed to the MXU in their stored dtype with f32 accumulation."""
    B, S, H = x.shape
    I = w1.shape[1]
    N = B * S
    x2 = x.reshape(N, H)

    # Accept 1-D PyTorch-style params.
    gamma = gamma.reshape(1, H)
    beta = beta.reshape(1, H)
    b1 = b1.reshape(1, I)
    b2 = b2.reshape(1, H)

    w_dt = w1.dtype
    w_it = jnp.dtype(w_dt).itemsize
    x_it = jnp.dtype(x.dtype).itemsize

    # --- Generation-aware sizing (v7x: 64 MiB VMEM; v5e/v6e: 128 MiB) ---
    try:
        vmem_cap = int(pltpu.get_tpu_info().vmem_capacity_bytes)
    except Exception:
        vmem_cap = 64 << 20
    big_vmem = vmem_cap >= (100 << 20)

    if tm is None:
        tm = 512 if big_vmem else 256
    TM = min(tm, max(8, ((N + 7) // 8) * 8))        # row tile, multiple of 8 (f32 sublanes)
    TI = ti if ti is not None else _pick_ti(I, cap=512 if big_vmem else 256)

    grid = (pl.cdiv(N, TM), I // TI)

    # --- VMEM budget: streamed tiles double-buffered, resident params single-buffered,
    #     plus scratches and f32 temporaries. ---
    bytes_stream = 2 * ((H * TI + TI * H + TI) * w_it     # w1, w2, b1 chunks
                        + 2 * TM * H * x_it)              # x in + out tiles
    bytes_params = (3 * H) * w_it                         # gamma, beta, b2 (Buffered(1))
    bytes_scratch = TM * H * (w_it + 4)                   # h cache + f32 accumulator
    bytes_tmp = TM * TI * 4 + TM * H * 4                  # f32 h1 chunk + LN temporaries
    vmem_need = int(1.3 * (bytes_stream + bytes_params + bytes_scratch + bytes_tmp))
    vmem_limit = int(min(max(vmem_need, 32 << 20), int(0.875 * vmem_cap)))

    cost = pl.CostEstimate(
        flops=int(4 * N * H * I + 10 * N * H),
        transcendentals=int(N),
        bytes_accessed=int(2 * N * H * x_it + (2 * H * I + I + 3 * H) * w_it),
    )

    out = pl.pallas_call(
        intermediate_kernel,
        out_shape=jax.ShapeDtypeStruct((N, H), x.dtype),
        grid=grid,
        in_specs=[
            pl.BlockSpec((TM, H), lambda i, k: (i, 0)),                  # x: resident over k
            pl.BlockSpec((1, H), lambda i, k: (0, 0),
                         pipeline_mode=pl.Buffered(1)),                  # gamma
            pl.BlockSpec((1, H), lambda i, k: (0, 0),
                         pipeline_mode=pl.Buffered(1)),                  # beta
            pl.BlockSpec((H, TI), lambda i, k: (0, k)),                  # w1 chunk
            pl.BlockSpec((1, TI), lambda i, k: (0, k)),                  # b1 chunk
            pl.BlockSpec((TI, H), lambda i, k: (k, 0)),                  # w2 chunk
            pl.BlockSpec((1, H), lambda i, k: (0, 0),
                         pipeline_mode=pl.Buffered(1)),                  # b2
        ],
        out_specs=pl.BlockSpec((TM, H), lambda i, k: (i, 0)),
        scratch_shapes=[
            pltpu.VMEM((TM, H), w_dt),          # cached LayerNorm output (MXU operand dtype)
            pltpu.VMEM((TM, H), jnp.float32),   # f32 accumulator for second GEMM
        ],
        compiler_params=pltpu.CompilerParams(
            dimension_semantics=("parallel", "arbitrary"),
            vmem_limit_bytes=vmem_limit,
        ),
        cost_estimate=cost,
    )(x2, gamma, beta, w1, b1, w2, b2)

    return out.reshape(B, S, H)


def reference_forward(x, gamma, beta, w1, b1, w2, b2):
    xf = x.astype(jnp.float32)
    u = jnp.mean(xf, axis=-1, keepdims=True)
    s = jnp.mean((xf - u) ** 2, axis=-1, keepdims=True)
    xn = (xf - u) / jnp.sqrt(s + EPS)
    h = gamma.reshape(1, -1) * xn + beta.reshape(1, -1)
    h1 = jnp.maximum(h @ w1 + b1.reshape(1, -1), 0.0)
    h2 = h1 @ w2 + b2.reshape(1, -1)
    return (h2 + xf).astype(x.dtype)


if __name__ == "__main__":
    # Small shapes consistent with the module: batch=2, seq=8, hidden=32, intermediate=64
    B, S, H, I = 2, 8, 32, 64
    key = jax.random.PRNGKey(0)
    kx, kw1, kb1, kw2, kb2 = jax.random.split(key, 5)

    x = jax.random.normal(kx, (B, S, H), dtype=jnp.float32)

    # LayerNorm params: ones / zeros (as in the PyTorch __init__)
    gamma = jnp.ones((H,), dtype=jnp.float32)
    beta = jnp.zeros((H,), dtype=jnp.float32)

    # Linear params, deterministic init, stored as (in, out)
    w1 = jax.random.normal(kw1, (H, I), dtype=jnp.float32) * 0.02
    b1 = jax.random.normal(kb1, (I,), dtype=jnp.float32) * 0.02
    w2 = jax.random.normal(kw2, (I, H), dtype=jnp.float32) * 0.02
    b2 = jax.random.normal(kb2, (H,), dtype=jnp.float32) * 0.02

    out = intermediate_forward(x, gamma, beta, w1, b1, w2, b2)
    out = jax.block_until_ready(out)

    ref = reference_forward(x, gamma, beta, w1, b1, w2, b2)
    assert out.shape == (B, S, H)
    assert jnp.allclose(out, ref, atol=1e-5, rtol=1e-5), "mismatch vs reference"

    print("KERNEL_OK")
</pallas_src>

<mosaic_0001>
module attributes {stable_mosaic.version = 11 : i64} {
  func.func @intermediate_kernel(%arg0: i32, %arg1: i32, %arg2: memref<16x32xf32, #tpu.memory_space<vmem>>, %arg3: memref<1x32xf32, #tpu.memory_space<vmem>>, %arg4: memref<1x32xf32, #tpu.memory_space<vmem>>, %arg5: memref<32x64xf32, #tpu.memory_space<vmem>>, %arg6: memref<1x64xf32, #tpu.memory_space<vmem>>, %arg7: memref<64x32xf32, #tpu.memory_space<vmem>>, %arg8: memref<1x32xf32, #tpu.memory_space<vmem>>, %arg9: memref<16x32xf32, #tpu.memory_space<vmem>>, %arg10: memref<16x32xf32, #tpu.memory_space<vmem>>, %arg11: memref<16x32xf32, #tpu.memory_space<vmem>>) attributes {dimension_semantics = [#tpu.dimension_semantics<parallel>, #tpu.dimension_semantics<arbitrary>], iteration_bounds = array<i64: 1, 1>, scalar_prefetch = 0 : i64, scratch_operands = 2 : i64, tpu.core_type = #tpu.core_type<tc>, window_params = [{transform_indices = @transform_0, window_bounds = array<i64: 16, 32>}, {pipeline_mode = #tpu.pipeline_mode<synchronous>, transform_indices = @transform_1, window_bounds = array<i64: 1, 32>}, {pipeline_mode = #tpu.pipeline_mode<synchronous>, transform_indices = @transform_2, window_bounds = array<i64: 1, 32>}, {transform_indices = @transform_3, window_bounds = array<i64: 32, 64>}, {transform_indices = @transform_4, window_bounds = array<i64: 1, 64>}, {transform_indices = @transform_5, window_bounds = array<i64: 64, 32>}, {pipeline_mode = #tpu.pipeline_mode<synchronous>, transform_indices = @transform_6, window_bounds = array<i64: 1, 32>}, {transform_indices = @transform_7, window_bounds = array<i64: 16, 32>}]} {
    %c0_i32 = arith.constant 0 : i32
    %0 = arith.cmpi eq, %arg1, %c0_i32 : i32
    %1 = arith.extui %0 : i1 to i32
    %c0_i32_0 = arith.constant 0 : i32
    %2 = arith.cmpi ne, %1, %c0_i32_0 : i32
    scf.if %2 {
      %c0_16 = arith.constant 0 : index
      %c0_17 = arith.constant 0 : index
      %19 = vector.load %arg2[%c0_16, %c0_17] : memref<16x32xf32, #tpu.memory_space<vmem>>, vector<16x32xf32>
      %cst_18 = arith.constant dense<0.000000e+00> : vector<16xf32>
      %20 = vector.multi_reduction <add>, %19, %cst_18 [1] : vector<16x32xf32> to vector<16xf32>
      %21 = vector.shape_cast %20 : vector<16xf32> to vector<16x1xf32>
      %cst_19 = arith.constant 3.200000e+01 : f32
      %22 = vector.broadcast %cst_19 : f32 to vector<16x1xf32>
      %23 = arith.divf %21, %22 : vector<16x1xf32>
      %24 = vector.broadcast %23 : vector<16x1xf32> to vector<16x32xf32>
      %25 = arith.subf %19, %24 : vector<16x32xf32>
      %26 = arith.mulf %25, %25 : vector<16x32xf32>
      %cst_20 = arith.constant dense<0.000000e+00> : vector<16xf32>
      %27 = vector.multi_reduction <add>, %26, %cst_20 [1] : vector<16x32xf32> to vector<16xf32>
      %28 = vector.shape_cast %27 : vector<16xf32> to vector<16x1xf32>
      %cst_21 = arith.constant 3.200000e+01 : f32
      %29 = vector.broadcast %cst_21 : f32 to vector<16x1xf32>
      %30 = arith.divf %28, %29 : vector<16x1xf32>
      %cst_22 = arith.constant 9.99999996E-13 : f32
      %31 = vector.broadcast %cst_22 : f32 to vector<16x1xf32>
      %32 = arith.addf %30, %31 : vector<16x1xf32>
      %33 = math.rsqrt %32 : vector<16x1xf32>
      %34 = vector.broadcast %33 : vector<16x1xf32> to vector<16x32xf32>
      %35 = arith.mulf %25, %34 : vector<16x32xf32>
      %c0_23 = arith.constant 0 : index
      %c0_24 = arith.constant 0 : index
      %36 = vector.load %arg3[%c0_23, %c0_24] : memref<1x32xf32, #tpu.memory_space<vmem>>, vector<1x32xf32>
      %37 = vector.broadcast %36 : vector<1x32xf32> to vector<16x32xf32>
      %38 = arith.mulf %37, %35 : vector<16x32xf32>
      %c0_25 = arith.constant 0 : index
      %c0_26 = arith.constant 0 : index
      %39 = vector.load %arg4[%c0_25, %c0_26] : memref<1x32xf32, #tpu.memory_space<vmem>>, vector<1x32xf32>
      %40 = vector.broadcast %39 : vector<1x32xf32> to vector<16x32xf32>
      %41 = arith.addf %38, %40 : vector<16x32xf32>
      %c0_27 = arith.constant 0 : index
      %c0_28 = arith.constant 0 : index
      %42 = vector.load %arg10[%c0_27, %c0_28] : memref<16x32xf32, #tpu.memory_space<vmem>>, vector<16x32xf32>
      tpu.vector_store %arg10[%c0_27, %c0_28], %41 {strides = array<i32>} : memref<16x32xf32, #tpu.memory_space<vmem>>, vector<16x32xf32>,
      %cst_29 = arith.constant 0.000000e+00 : f32
      %43 = vector.broadcast %cst_29 : f32 to vector<16x32xf32>
      %c0_30 = arith.constant 0 : index
      %c0_31 = arith.constant 0 : index
      %44 = vector.load %arg11[%c0_30, %c0_31] : memref<16x32xf32, #tpu.memory_space<vmem>>, vector<16x32xf32>
      tpu.vector_store %arg11[%c0_30, %c0_31], %43 {strides = array<i32>} : memref<16x32xf32, #tpu.memory_space<vmem>>, vector<16x32xf32>,
    } else {
    }
    %c0 = arith.constant 0 : index
    %c0_1 = arith.constant 0 : index
    %3 = vector.load %arg10[%c0, %c0_1] : memref<16x32xf32, #tpu.memory_space<vmem>>, vector<16x32xf32>
    %c0_2 = arith.constant 0 : index
    %c0_3 = arith.constant 0 : index
    %4 = vector.load %arg5[%c0_2, %c0_3] : memref<32x64xf32, #tpu.memory_space<vmem>>, vector<32x64xf32>
    %cst = arith.constant dense<0.000000e+00> : vector<16x64xf32>
    %5 = tpu.matmul %3, %4, %cst {dimension_numbers = #tpu.dot_dimension_numbers<[1], [0], [0], [1], [0, 0, 1, 1], [], []>} : vector<16x32xf32>, vector<32x64xf32>, vector<16x64xf32> -> vector<16x64xf32>
    %c0_4 = arith.constant 0 : index
    %c0_5 = arith.constant 0 : index
    %6 = vector.load %arg6[%c0_4, %c0_5] : memref<1x64xf32, #tpu.memory_space<vmem>>, vector<1x64xf32>
    %7 = vector.broadcast %6 : vector<1x64xf32> to vector<16x64xf32>
    %8 = arith.addf %5, %7 : vector<16x64xf32>
    %cst_6 = arith.constant 0.000000e+00 : f32
    %9 = vector.broadcast %cst_6 : f32 to vector<16x64xf32>
    %10 = arith.maximumf %8, %9 : vector<16x64xf32>
    %c0_7 = arith.constant 0 : index
    %c0_8 = arith.constant 0 : index
    %11 = vector.load %arg11[%c0_7, %c0_8] : memref<16x32xf32, #tpu.memory_space<vmem>>, vector<16x32xf32>
    %c0_9 = arith.constant 0 : index
    %c0_10 = arith.constant 0 : index
    %12 = vector.load %arg7[%c0_9, %c0_10] : memref<64x32xf32, #tpu.memory_space<vmem>>, vector<64x32xf32>
    %cst_11 = arith.constant dense<0.000000e+00> : vector<16x32xf32>
    %13 = tpu.matmul %10, %12, %cst_11 {dimension_numbers = #tpu.dot_dimension_numbers<[1], [0], [0], [1], [0, 0, 1, 1], [], []>} : vector<16x64xf32>, vector<64x32xf32>, vector<16x32xf32> -> vector<16x32xf32>
    %14 = arith.addf %11, %13 : vector<16x32xf32>
    %c0_12 = arith.constant 0 : index
    %c0_13 = arith.constant 0 : index
    %15 = vector.load %arg11[%c0_12, %c0_13] : memref<16x32xf32, #tpu.memory_space<vmem>>, vector<16x32xf32>
    tpu.vector_store %arg11[%c0_12, %c0_13], %14 {strides = array<i32>} : memref<16x32xf32, #tpu.memory_space<vmem>>, vector<16x32xf32>,
    %c0_i32_14 = arith.constant 0 : i32
    %16 = arith.cmpi eq, %arg1, %c0_i32_14 : i32
    %17 = arith.extui %16 : i1 to i32
    %c0_i32_15 = arith.constant 0 : i32
    %18 = arith.cmpi ne, %17, %c0_i32_15 : i32
    scf.if %18 {
      %c0_16 = arith.constant 0 : index
      %c0_17 = arith.constant 0 : index
      %19 = vector.load %arg11[%c0_16, %c0_17] : memref<16x32xf32, #tpu.memory_space<vmem>>, vector<16x32xf32>
      %c0_18 = arith.constant 0 : index
      %c0_19 = arith.constant 0 : index
      %20 = vector.load %arg8[%c0_18, %c0_19] : memref<1x32xf32, #tpu.memory_space<vmem>>, vector<1x32xf32>
      %21 = vector.broadcast %20 : vector<1x32xf32> to vector<16x32xf32>
      %22 = arith.addf %19, %21 : vector<16x32xf32>
      %c0_20 = arith.constant 0 : index
      %c0_21 = arith.constant 0 : index
      %23 = vector.load %arg2[%c0_20, %c0_21] : memref<16x32xf32, #tpu.memory_space<vmem>>, vector<16x32xf32>
      %24 = arith.addf %22, %23 : vector<16x32xf32>
      %c0_22 = arith.constant 0 : index
      %c0_23 = arith.constant 0 : index
      %25 = vector.load %arg9[%c0_22, %c0_23] : memref<16x32xf32, #tpu.memory_space<vmem>>, vector<16x32xf32>
      tpu.vector_store %arg9[%c0_22, %c0_23], %24 {strides = array<i32>} : memref<16x32xf32, #tpu.memory_space<vmem>>, vector<16x32xf32>,
    } else {
    }
    return
  }
  func.func @transform_0(%arg0: i32, %arg1: i32) -> (i32, i32) {
    %c0_i32 = arith.constant 0 : i32
    %c0_i32_0 = arith.constant 0 : i32
    return %arg0, %c0_i32 : i32, i32
  }
  func.func @transform_1(%arg0: i32, %arg1: i32) -> (i32, i32) {
    %c0_i32 = arith.constant 0 : i32
    %c0_i32_0 = arith.constant 0 : i32
    %c0_i32_1 = arith.constant 0 : i32
    return %c0_i32, %c0_i32_0 : i32, i32
  }
  func.func @transform_2(%arg0: i32, %arg1: i32) -> (i32, i32) {
    %c0_i32 = arith.constant 0 : i32
    %c0_i32_0 = arith.constant 0 : i32
    %c0_i32_1 = arith.constant 0 : i32
    return %c0_i32, %c0_i32_0 : i32, i32
  }
  func.func @transform_3(%arg0: i32, %arg1: i32) -> (i32, i32) {
    %c0_i32 = arith.constant 0 : i32
    %c0_i32_0 = arith.constant 0 : i32
    return %c0_i32, %arg1 : i32, i32
  }
  func.func @transform_4(%arg0: i32, %arg1: i32) -> (i32, i32) {
    %c0_i32 = arith.constant 0 : i32
    %c0_i32_0 = arith.constant 0 : i32
    return %c0_i32, %arg1 : i32, i32
  }
  func.func @transform_5(%arg0: i32, %arg1: i32) -> (i32, i32) {
    %c0_i32 = arith.constant 0 : i32
    %c0_i32_0 = arith.constant 0 : i32
    return %arg1, %c0_i32 : i32, i32
  }
  func.func @transform_6(%arg0: i32, %arg1: i32) -> (i32, i32) {
    %c0_i32 = arith.constant 0 : i32
    %c0_i32_0 = arith.constant 0 : i32
    %c0_i32_1 = arith.constant 0 : i32
    return %c0_i32, %c0_i32_0 : i32, i32
  }
  func.func @transform_7(%arg0: i32, %arg1: i32) -> (i32, i32) {
    %c0_i32 = arith.constant 0 : i32
    %c0_i32_0 = arith.constant 0 : i32
    return %arg0, %c0_i32 : i32, i32
  }
}

</mosaic_0001>

<llo_original>
// kernel: tpu_custom_call.1
$region0: #{tpu_custom_call.1}
  #allocation0 [shape = 'u32[]', space=smem, size = 0x4, offset = 0x4, fixed_abs, tag = 'smem constant byte address 0x4 - core index']
  #allocation1 [shape = 'u32[72,128]{1,0:T(1,128)}', space=vmem, size = 0x9000, scoped, tag = 'internal scratch']
  #allocation2 [shape = 'f32[16,32]{1,0:T(8,128)}', space=vmem, size = 0x2000, scoped, tag = 'scratch operand']
  #allocation3 [shape = 'f32[16,32]{1,0:T(8,128)}', space=vmem, size = 0x2000, scoped, tag = 'scratch operand']
  %s0 = inlined_call_operand.vmem [shape: f32[16,32], index: 0, kind: input, shape index: {}]
  %s1 = inlined_call_operand.vmem [shape: f32[1,32], index: 1, kind: input, shape index: {}]
  %s2 = inlined_call_operand.vmem [shape: f32[1,32], index: 2, kind: input, shape index: {}]
  %s3 = inlined_call_operand.vmem [shape: f32[32,64], index: 3, kind: input, shape index: {}]
  %s4 = inlined_call_operand.vmem [shape: f32[1,64], index: 4, kind: input, shape index: {}]
  %s5 = inlined_call_operand.vmem [shape: f32[64,32], index: 5, kind: input, shape index: {}]
  %s6 = inlined_call_operand.vmem [shape: f32[1,32], index: 6, kind: input, shape index: {}]
  %s7 = inlined_call_operand.hbm [shape: f32[16,32], index: 7, kind: output, shape index: {}]
  %s8 = sld [smem:[#allocation0]]
  $region46: #{tpu_custom_call.1} parent=0
    _
  %s10 = ssub.s32 1, %s8
  %s11 = scalar_select 0, %s10, %s8
  $region1: #{tpu_custom_call.1} parent=0
    #allocation4 [shape = 'u8[8192]{0}', space=vmem, size = 0x2000, scoped, tag = 'output window, operand 0, single buffered']
    #allocation5 [shape = 's32[1]{0}', space=sflag, size = 0x4, scoped, tag = 'scoped memory for tpu_custom_call.1']
    %12 = vsyncpa [#allocation5], 0
    // Predicated region
    $region2: #{tpu_custom_call.1} parent=1 // pred_check
      _
    $region3: #{tpu_custom_call.1} parent=1 // pred_check_branch
      %14 = sbr.rel (0) target = $region5
    $region4: #{tpu_custom_call.1} parent=1 // pred_region
      _
    $region5: #{tpu_custom_call.1} parent=1 // pred_fallthru
      _
    // Predicated region
    $region6: #{tpu_custom_call.1} parent=1 // pred_check
      _
    $region7: #{tpu_custom_call.1} parent=1 // pred_check_branch
      %16 = sbr.rel (0) target = $region9
    $region8: #{tpu_custom_call.1} parent=1 // pred_region
      _
    $region9: #{tpu_custom_call.1} parent=1 // pred_fallthru
      _
    // Predicated region
    $region10: #{tpu_custom_call.1} parent=1 // pred_check
      _
    $region11: #{tpu_custom_call.1} parent=1 // pred_check_branch
      %18 = sbr.rel (0) target = $region13
    $region12: #{tpu_custom_call.1} parent=1 // pred_region
      _
    $region13: #{tpu_custom_call.1} parent=1 // pred_fallthru
      _
    // Predicated region
    $region14: #{tpu_custom_call.1} parent=1 // pred_check
      _
    $region15: #{tpu_custom_call.1} parent=1 // pred_check_branch
      %20 = sbr.rel (0) target = $region17
    $region16: #{tpu_custom_call.1} parent=1 // pred_region
      _
    $region17: #{tpu_custom_call.1} parent=1 // pred_fallthru
      _
    // Predicated region
    $region18: #{tpu_custom_call.1} parent=1 // pred_check
      _
    $region19: #{tpu_custom_call.1} parent=1 // pred_check_branch
      %22 = sbr.rel (0) target = $region21
    $region20: #{tpu_custom_call.1} parent=1 // pred_region
      _
    $region21: #{tpu_custom_call.1} parent=1 // pred_fallthru
      _
    // Predicated region
    $region22: #{tpu_custom_call.1} parent=1 // pred_check
      _
    $region23: #{tpu_custom_call.1} parent=1 // pred_check_branch
      %24 = sbr.rel (0) target = $region25
    $region24: #{tpu_custom_call.1} parent=1 // pred_region
      _
    $region25: #{tpu_custom_call.1} parent=1 // pred_fallthru
      _
    // Predicated region
    $region26: #{tpu_custom_call.1} parent=1 // pred_check
      _
    $region27: #{tpu_custom_call.1} parent=1 // pred_check_branch
      %26 = sbr.rel (0) target = $region29
    $region28: #{tpu_custom_call.1} parent=1 // pred_region
      _
    $region29: #{tpu_custom_call.1} parent=1 // pred_fallthru
      _
    %p27 = scmp.eq.s32.totalorder 0, 0
    // Predicated region
    $region30: #{tpu_custom_call.1} parent=1 // pred_check
      %p28 = pneg %p27
    $region31: #{tpu_custom_call.1} parent=1 // pred_check_branch
      %30 = sbr.rel (%p28) target = $region33
    $region32: #{tpu_custom_call.1} parent=1 // pred_region
      %v31 = vld [vmem:[%s0] sm:$0xff]
      %v32 = vld [vmem:[%s0 + $0x8] sm:$0xff]
      %vm33 = vcmask 261120
      %v34 = vsel %vm33, %v31, 0.0
      %35 = vadd.xlane.f32.xlu0 %v34
      %v36 = vpop.xlane.xlu0 %35
      %v37 = vsel %vm33, %v32, 0.0
      %38 = vadd.xlane.f32.xlu0 %v37
      %v39 = vpop.xlane.xlu0 %38
      %v40 = vrcp.pop 32.0
      %v41 = vmul.f32 32.0, %v40
      %v42 = vsub.f32 1.0, %v41
      %v43 = vmul.f32 %v40, %v42
      %v44 = vadd.f32 %v40, %v43
      %vm45 = vweird.f32 %v40
      %v46 = vsel %vm45, %v40, %v44
      %v47 = vmul.f32 %v36, %v46
      %v48 = vmul.f32 %v39, %v46
      %v49 = vsub.f32 %v31, %v47
      %v50 = vsub.f32 %v32, %v48
      %v51 = vmul.f32 %v49, %v49
      %v52 = vmul.f32 %v50, %v50
      %v53 = vsel %vm33, %v51, 0.0
      %54 = vadd.xlane.f32.xlu0 %v53
      %v55 = vpop.xlane.xlu0 %54
      %v56 = vsel %vm33, %v52, 0.0
      %57 = vadd.xlane.f32.xlu0 %v56
      %v58 = vpop.xlane.xlu0 %57
      %v59 = vmul.f32 %v55, %v46
      %v60 = vmul.f32 %v58, %v46
      %v61 = vadd.f32 %v59, 1e-12
      %v62 = vadd.f32 %v60, 1e-12
      %v63 = vrsqrt.pop %v61
      %v64 = vmul.f32 %v63, %v61
      %v65 = vmul.f32 %v64, %v63
      %v66 = vmul.f32 0.5, %v65
      %v67 = vsub.f32 1.5, %v66
      %v68 = vmul.f32 %v63, %v67
      %vm69 = vweird.f32 %v61
      %vm70 = vweird.f32 %v63
      %vm71 = vmor %vm69, %vm70
      %v72 = vsel %vm71, %v63, %v68
      %v73 = vrsqrt.pop %v62
      %v74 = vmul.f32 %v73, %v62
      %v75 = vmul.f32 %v74, %v73
      %v76 = vmul.f32 0.5, %v75
      %v77 = vsub.f32 1.5, %v76
      %v78 = vmul.f32 %v73, %v77
      %vm79 = vweird.f32 %v62
      %vm80 = vweird.f32 %v73
      %vm81 = vmor %vm79, %vm80
      %v82 = vsel %vm81, %v73, %v78
      %v83 = vmul.f32 %v49, %v72
      %v84 = vmul.f32 %v50, %v82
      %v85 = vld [vmem:[%s1] sm:$0x1]
      %v87 = vperm.slane %v85, 0
      %v89 = vmul.f32 %v87, %v83
      %v90 = vmul.f32 %v87, %v84
      %v91 = vld [vmem:[%s2] sm:$0x1]
      %v93 = vperm.slane %v91, 0
      %v95 = vadd.f32 %v89, %v93
      %v96 = vadd.f32 %v90, %v93
      %97 = vst.msk [vmem:[#allocation2] sm:$0xff] %vm33, %v95
      %98 = vst.msk [vmem:[#allocation2 + $0x8] sm:$0xff] %vm33, %v96
      %99 = vst.msk [vmem:[#allocation3] sm:$0xff] %vm33, 0.0
      %100 = vst.msk [vmem:[#allocation3 + $0x8] sm:$0xff] %vm33, 0.0
    $region33: #{tpu_custom_call.1} parent=1 // pred_fallthru
      _
    %v101 = vld [vmem:[#allocation2] sm:$0xff]
    %v102 = vld [vmem:[#allocation2 + $0x8] sm:$0xff]
    %v103 = vld [vmem:[%s3] sm:$0xff]
    %v104 = vld [vmem:[%s3 + $0x8] sm:$0xff]
    %v105 = vld [vmem:[%s3 + $0x10] sm:$0xff]
    %v106 = vld [vmem:[%s3 + $0x18] sm:$0xff]
    %v107 = vld [vmem:[%s4] sm:$0x1]
    %v109 = vperm.slane %v107, 0
    %vm111 = vcmask 261120
    %v113 = vsel %vm111, %v101, 0
    %v116 = vsel %vm111, %v102, 0
    %118 = vmatpush.msra.mxu0 0.0
    %119 = vmatpush.msra.mxu0 0.0
    %120 = vmatpush.msra.mxu0 0.0
    %121 = vmatpush.msra.mxu0 0.0
    %122 = vmatpush.msra.mxu0 0.0
    %123 = vmatpush.msra.mxu0 0.0
    %124 = vmatpush.msra.mxu0 0.0
    %125 = vmatpush.msra.mxu0 0.0
    %126 = vmatpush.msra.mxu0 0.0
    %127 = vmatpush.msra.mxu0 0.0
    %128 = vmatpush.msra.mxu0 0.0
    %129 = vmatpush.msra.mxu0 0.0
    %130 = vmatpush.msra.mxu0 %v106
    %131 = vmatpush.msra.mxu0 %v105
    %132 = vmatpush.msra.mxu0 %v104
    %133 = vmatpush.msra.mxu0 %v103
    %134 = vmatmul.f32.gmra.mxu0 %v113
    %v135 = vpop.f32.mrf.mxu0
    %v136 = vadd.f32 %v109, %v135
    %137 = vmatmul.f32.gmra.mxu0 %v116
    %v138 = vpop.f32.mrf.mxu0
    %v139 = vadd.f32 %v109, %v138
    %140 = vdwg.mxu0
    %v141 = vmax.f32 %v136, 0.0
    %v142 = vmax.f32 %v139, 0.0
    %v143 = vld [vmem:[#allocation3] sm:$0xff]
    %v144 = vld [vmem:[#allocation3 + $0x8] sm:$0xff]
    %v145 = vld [vmem:[%s5] sm:$0xff]
    %v146 = vld [vmem:[%s5 + $0x8] sm:$0xff]
    %v147 = vld [vmem:[%s5 + $0x10] sm:$0xff]
    %v148 = vld [vmem:[%s5 + $0x18] sm:$0xff]
    %v149 = vld [vmem:[%s5 + $0x20] sm:$0xff]
    %v150 = vld [vmem:[%s5 + $0x28] sm:$0xff]
    %v151 = vld [vmem:[%s5 + $0x30] sm:$0xff]
    %v152 = vld [vmem:[%s5 + $0x38] sm:$0xff]
    %vm153 = vcmask 523264
    %v155 = vsel %vm153, %v141, 0
    %v158 = vsel %vm153, %v142, 0
    %160 = vmatpush.msra.mxu0 0.0
    %161 = vmatpush.msra.mxu0 0.0
    %162 = vmatpush.msra.mxu0 0.0
    %163 = vmatpush.msra.mxu0 0.0
    %164 = vmatpush.msra.mxu0 0.0
    %165 = vmatpush.msra.mxu0 0.0
    %166 = vmatpush.msra.mxu0 0.0
    %167 = vmatpush.msra.mxu0 0.0
    %168 = vmatpush.msra.mxu0 %v152
    %169 = vmatpush.msra.mxu0 %v151
    %170 = vmatpush.msra.mxu0 %v150
    %171 = vmatpush.msra.mxu0 %v149
    %172 = vmatpush.msra.mxu0 %v148
    %173 = vmatpush.msra.mxu0 %v147
    %174 = vmatpush.msra.mxu0 %v146
    %175 = vmatpush.msra.mxu0 %v145
    %176 = vmatmul.f32.gmra.mxu0 %v155
    %v177 = vpop.f32.mrf.mxu0
    %v178 = vadd.f32 0.0, %v177
    %179 = vmatmul.f32.gmra.mxu0 %v158
    %v180 = vpop.f32.mrf.mxu0
    %v181 = vadd.f32 0.0, %v180
    %182 = vdwg.mxu0
    %v183 = vadd.f32 %v143, %v178
    %v184 = vadd.f32 %v144, %v181
    %185 = vst.msk [vmem:[#allocation3] sm:$0xff] %vm111, %v183
    %186 = vst.msk [vmem:[#allocation3 + $0x8] sm:$0xff] %vm111, %v184
    // Predicated region
    $region34: #{tpu_custom_call.1} parent=1 // pred_check
      %p187 = pneg %p27
    $region35: #{tpu_custom_call.1} parent=1 // pred_check_branch
      %189 = sbr.rel (%p187) target = $region37
    $region36: #{tpu_custom_call.1} parent=1 // pred_region
      %v190 = vld [vmem:[#allocation3] sm:$0xff]
      %v191 = vld [vmem:[#allocation3 + $0x8] sm:$0xff]
      %v192 = vld [vmem:[%s6] sm:$0x1]
      %v194 = vperm.slane %v192, 0
      %v196 = vadd.f32 %v190, %v194
      %v197 = vadd.f32 %v191, %v194
      %v198 = vld [vmem:[%s0] sm:$0xff]
      %v199 = vld [vmem:[%s0 + $0x8] sm:$0xff]
      %v200 = vadd.f32 %v196, %v198
      %v201 = vadd.f32 %v197, %v199
      %202 = vst.msk [vmem:[#allocation4] sm:$0xff] %vm111, %v200
      %203 = vst.msk [vmem:[#allocation4 + $0x8] sm:$0xff] %vm111, %v201
    $region37: #{tpu_custom_call.1} parent=1 // pred_fallthru
      _
    // Predicated region
    $region38: #{tpu_custom_call.1} parent=1 // pred_check
      _
    $region39: #{tpu_custom_call.1} parent=1 // pred_check_branch
      %205 = sbr.rel (0) target = $region41
    $region40: #{tpu_custom_call.1} parent=1 // pred_region
      %207 = vsyncadd [#allocation5], 0
      %s208 = sshll.u32 [#allocation4], 4
      %s209 = int_to_ptr.vmem [resolvable:$true] %s208
      %s210 = sshll.u32 %s7, 4
      %s211 = int_to_ptr.hbm [resolvable:$true] %s210
      %216 = dma.vmem_to_hbm [thread:$0]  %s209, 256, %s211, [#allocation5], 128, 128, 8
    $region41: #{tpu_custom_call.1} parent=1 // pred_fallthru
      _
    // Predicated region
    $region42: #{tpu_custom_call.1} parent=1 // pred_check
      _
    $region43: #{tpu_custom_call.1} parent=1 // pred_check_branch
      %218 = sbr.rel (0) target = $region45
    $region44: #{tpu_custom_call.1} parent=1 // pred_region
      %220 = dma.done [#allocation5], 256
    $region45: #{tpu_custom_call.1} parent=1 // pred_fallthru
      _
    %221 = vsyncpa [#allocation5], 1

</llo_original>
